<compile_context>
chip_gen: v6e
topology: v6e:2x2x1
jax: 0.10.0
libtpu: 0.0.40
codegen_flags: <defaults>
</compile_context>

<pallas_src>
import numpy as np
import jax
import jax.numpy as jnp
from jax.experimental import pallas as pl
from jax.experimental.pallas import tpu as pltpu


def code_layer_kernel(x_ref, w1_ref, b1_ref, w2_ref, b2_ref, o_ref):
    # x_ref : [TM, in_w]      (in_w = n_input * p)
    # w1_ref: [in_w, hid_w]   b1_ref: [1, hid_w]      (hid_w = mid * p)
    # w2_ref: [hid_w, out_w]  b2_ref: [1, out_w]      (out_w = n_output * p)
    # o_ref : [TM, out_w]
    x = x_ref[...]
    h = jnp.dot(x, w1_ref[...], preferred_element_type=jnp.float32) + b1_ref[...]
    # TODO(synk): Dropout(p=0.2) skipped -- eval/inference-mode semantics only.
    h = jnp.maximum(h, 0.0)  # ReLU
    y = jnp.dot(h, w2_ref[...], preferred_element_type=jnp.float32) + b2_ref[...]
    o_ref[...] = y.astype(o_ref.dtype)


def _round_up(x, m):
    return ((x + m - 1) // m) * m


def _pick_packing(m):
    for p in (16, 8, 4, 2):
        if m % p == 0:
            return p
    return 1


def code_layer_forward(x, params, block_rows=32768, vmem_row_budget=24 << 20):
    """x: [..., n_input] float32. params: dict of (w1, b1, w2, b2) with w as [in, out]."""
    w1, b1, w2, b2 = params["w1"], params["b1"], params["w2"], params["b2"]
    lead_shape = x.shape[:-1]
    n_input = x.shape[-1]
    mid = w1.shape[-1]
    n_output = w2.shape[-1]

    x2d = x.reshape(-1, n_input)
    M = x2d.shape[0]

    # ---- lane-dense packing (free row-major reshape; no HBM copy, no pad) ----
    p = _pick_packing(M)
    in_w, hid_w, out_w = n_input * p, mid * p, n_output * p
    Mp = M // p
    xp = x2d.reshape(Mp, in_w)

    if p == 1:
        w1p, b1p, w2p, b2p = w1, b1, w2, b2
    else:
        eye = jnp.eye(p, dtype=w1.dtype)
        w1p = jnp.kron(eye, w1)          # block-diagonal [in_w, hid_w], tiny one-time cost
        w2p = jnp.kron(eye, w2)          # block-diagonal [hid_w, out_w]
        b1p = jnp.tile(b1, (1, p))       # [1, hid_w]
        b2p = jnp.tile(b2, (1, p))       # [1, out_w]

    # ---- row-tile size (packed rows), from a VMEM budget good for all gens ---
    lane = lambda w: _round_up(w, 128)   # minor-dim lane padding in VMEM
    bytes_per_row = 4 * (2 * lane(in_w) + 2 * lane(out_w) + lane(hid_w))
    if Mp <= 8:
        tm = Mp                          # single block == full array (tiny M)
    else:
        tm = _round_up(max(block_rows // p, 1), 8)
        tm = min(tm, max((vmem_row_budget // bytes_per_row) // 8 * 8, 8))
        tm = min(tm, _round_up(pl.cdiv(Mp, 2), 8))   # >= 2 steps (v7x megacore)
        tm = max(tm, 8)
    grid = (pl.cdiv(Mp, tm),)

    # VMEM limit = computed requirement + slack (v7x has only 64 MiB physical).
    weight_bytes = 4 * 2 * (in_w * hid_w + hid_w * out_w + hid_w + out_w)
    vmem_limit = int(min(max(tm * bytes_per_row + weight_bytes + (8 << 20),
                             16 << 20), 56 << 20))

    flops = 2 * Mp * (in_w * hid_w + hid_w * out_w)
    bytes_accessed = 4 * (Mp * (in_w + out_w)
                          + in_w * hid_w + hid_w + hid_w * out_w + out_w)

    out_p = pl.pallas_call(
        code_layer_kernel,
        out_shape=jax.ShapeDtypeStruct((Mp, out_w), jnp.float32),
        grid=grid,
        in_specs=[
            # X: one packed row-tile per grid step (double-buffered by Pallas).
            pl.BlockSpec((tm, in_w), lambda i: (i, 0)),
            # Weights / biases: constant block -> resident in VMEM for all steps.
            pl.BlockSpec(w1p.shape, lambda i: (0, 0)),
            pl.BlockSpec(b1p.shape, lambda i: (0, 0)),
            pl.BlockSpec(w2p.shape, lambda i: (0, 0)),
            pl.BlockSpec(b2p.shape, lambda i: (0, 0)),
        ],
        out_specs=pl.BlockSpec((tm, out_w), lambda i: (i, 0)),
        compiler_params=pltpu.CompilerParams(
            dimension_semantics=("parallel",),
            vmem_limit_bytes=vmem_limit,
        ),
        cost_estimate=pl.CostEstimate(
            flops=flops, transcendentals=0, bytes_accessed=bytes_accessed),
    )(xp, w1p, b1p, w2p, b2p)

    # Free row-major un-packing back to [..., n_output].
    return out_p.reshape(*lead_shape, n_output)


def init_code_layer_params(key, n_input, n_output, n_layers=2):
    """Deterministic parameter init mirroring CodeLayer.__init__ shapes."""
    dims = np.linspace(n_input, n_output, n_layers + 1, dtype=int)
    assert n_layers == 2, "this script instantiates the default n_layers=2 case"
    mid = int(dims[1])
    k1, k2, k3, k4 = jax.random.split(key, 4)
    # PyTorch Linear weight is [out, in]; we store the transpose [in, out].
    w1 = jax.random.normal(k1, (n_input, mid), jnp.float32) * 0.05
    b1 = jax.random.normal(k2, (1, mid), jnp.float32) * 0.05
    w2 = jax.random.normal(k3, (mid, n_output), jnp.float32) * 0.05
    b2 = jax.random.normal(k4, (1, n_output), jnp.float32) * 0.05
    return {"w1": w1, "b1": b1, "w2": w2, "b2": b2}


def _reference(x, params):
    h = jnp.maximum(x @ params["w1"] + params["b1"][0], 0.0)
    return h @ params["w2"] + params["b2"][0]


if __name__ == "__main__":
    n_input, n_output, n_layers = 32, 8, 2     # linspace -> [32, 20, 8]
    key = jax.random.PRNGKey(0)
    kx, kp = jax.random.split(key)
    params = init_code_layer_params(kp, n_input, n_output, n_layers)

    def check(x, **kw):
        out = jax.block_until_ready(code_layer_forward(x, params, **kw))
        ref = _reference(x, params)
        assert out.shape == (*x.shape[:-1], n_output)
        err = float(jnp.max(jnp.abs(out - ref)))
        assert err < 2e-3, f"max abs err {err}"

    # 1) Module-consistent small shape (batch=2, seq=8): M=16 -> 16-way packed,
    #    single tile, natively 128-wide (lane-dense) output.
    check(jax.random.normal(kx, (2, 8, n_input), jnp.float32))

    # 2) Multi-step pipelined path with a non-divisible (partial) last block:
    #    M=528 -> 33 packed rows, tile of 8 -> grid of 5.
    check(jax.random.normal(jax.random.PRNGKey(1), (33, 16, n_input), jnp.float32),
          block_rows=128)

    # 3) Ragged M (15 rows): unpacked fallback (p=1) + partial last block.
    check(jax.random.normal(jax.random.PRNGKey(2), (3, 5, n_input), jnp.float32),
          block_rows=128)

    # 4) 8-way packing (M divisible by 8 but not 16).
    check(jax.random.normal(jax.random.PRNGKey(3), (8, 5, n_input), jnp.float32))

    print("KERNEL_OK")
</pallas_src>

<mosaic_0001>
module attributes {stable_mosaic.version = 11 : i64} {
  func.func @code_layer_kernel(%arg0: i32, %arg1: memref<1x512xf32, #tpu.memory_space<vmem>>, %arg2: memref<512x320xf32, #tpu.memory_space<vmem>>, %arg3: memref<1x320xf32, #tpu.memory_space<vmem>>, %arg4: memref<320x128xf32, #tpu.memory_space<vmem>>, %arg5: memref<1x128xf32, #tpu.memory_space<vmem>>, %arg6: memref<1x128xf32, #tpu.memory_space<vmem>>) attributes {dimension_semantics = [#tpu.dimension_semantics<parallel>], iteration_bounds = array<i64: 1>, scalar_prefetch = 0 : i64, scratch_operands = 0 : i64, tpu.core_type = #tpu.core_type<tc>, window_params = [{transform_indices = @transform_0, window_bounds = array<i64: 1, 512>}, {pipeline_mode = #tpu.pipeline_mode<synchronous>, transform_indices = @transform_1, window_bounds = array<i64: 512, 320>}, {pipeline_mode = #tpu.pipeline_mode<synchronous>, transform_indices = @transform_2, window_bounds = array<i64: 1, 320>}, {pipeline_mode = #tpu.pipeline_mode<synchronous>, transform_indices = @transform_3, window_bounds = array<i64: 320, 128>}, {pipeline_mode = #tpu.pipeline_mode<synchronous>, transform_indices = @transform_4, window_bounds = array<i64: 1, 128>}, {transform_indices = @transform_5, window_bounds = array<i64: 1, 128>}]} {
    %c0 = arith.constant 0 : index
    %c0_0 = arith.constant 0 : index
    %0 = vector.load %arg1[%c0, %c0_0] : memref<1x512xf32, #tpu.memory_space<vmem>>, vector<1x512xf32>
    %c0_1 = arith.constant 0 : index
    %c0_2 = arith.constant 0 : index
    %1 = vector.load %arg2[%c0_1, %c0_2] : memref<512x320xf32, #tpu.memory_space<vmem>>, vector<512x320xf32>
    %cst = arith.constant dense<0.000000e+00> : vector<1x320xf32>
    %2 = tpu.matmul %0, %1, %cst {dimension_numbers = #tpu.dot_dimension_numbers<[1], [0], [0], [1], [0, 0, 1, 1], [], []>} : vector<1x512xf32>, vector<512x320xf32>, vector<1x320xf32> -> vector<1x320xf32>
    %c0_3 = arith.constant 0 : index
    %c0_4 = arith.constant 0 : index
    %3 = vector.load %arg3[%c0_3, %c0_4] : memref<1x320xf32, #tpu.memory_space<vmem>>, vector<1x320xf32>
    %4 = arith.addf %2, %3 : vector<1x320xf32>
    %cst_5 = arith.constant 0.000000e+00 : f32
    %5 = vector.broadcast %cst_5 : f32 to vector<1x320xf32>
    %6 = arith.maximumf %4, %5 : vector<1x320xf32>
    %c0_6 = arith.constant 0 : index
    %c0_7 = arith.constant 0 : index
    %7 = vector.load %arg4[%c0_6, %c0_7] : memref<320x128xf32, #tpu.memory_space<vmem>>, vector<320x128xf32>
    %cst_8 = arith.constant dense<0.000000e+00> : vector<1x128xf32>
    %8 = tpu.matmul %6, %7, %cst_8 {dimension_numbers = #tpu.dot_dimension_numbers<[1], [0], [0], [1], [0, 0, 1, 1], [], []>} : vector<1x320xf32>, vector<320x128xf32>, vector<1x128xf32> -> vector<1x128xf32>
    %c0_9 = arith.constant 0 : index
    %c0_10 = arith.constant 0 : index
    %9 = vector.load %arg5[%c0_9, %c0_10] : memref<1x128xf32, #tpu.memory_space<vmem>>, vector<1x128xf32>
    %10 = arith.addf %8, %9 : vector<1x128xf32>
    %c0_11 = arith.constant 0 : index
    %c0_12 = arith.constant 0 : index
    %11 = vector.load %arg6[%c0_11, %c0_12] : memref<1x128xf32, #tpu.memory_space<vmem>>, vector<1x128xf32>
    tpu.vector_store %arg6[%c0_11, %c0_12], %10 {strides = array<i32>} : memref<1x128xf32, #tpu.memory_space<vmem>>, vector<1x128xf32>,
    return
  }
  func.func @transform_0(%arg0: i32) -> (i32, i32) {
    %c0_i32 = arith.constant 0 : i32
    %c0_i32_0 = arith.constant 0 : i32
    return %arg0, %c0_i32 : i32, i32
  }
  func.func @transform_1(%arg0: i32) -> (i32, i32) {
    %c0_i32 = arith.constant 0 : i32
    %c0_i32_0 = arith.constant 0 : i32
    %c0_i32_1 = arith.constant 0 : i32
    return %c0_i32, %c0_i32_0 : i32, i32
  }
  func.func @transform_2(%arg0: i32) -> (i32, i32) {
    %c0_i32 = arith.constant 0 : i32
    %c0_i32_0 = arith.constant 0 : i32
    %c0_i32_1 = arith.constant 0 : i32
    return %c0_i32, %c0_i32_0 : i32, i32
  }
  func.func @transform_3(%arg0: i32) -> (i32, i32) {
    %c0_i32 = arith.constant 0 : i32
    %c0_i32_0 = arith.constant 0 : i32
    %c0_i32_1 = arith.constant 0 : i32
    return %c0_i32, %c0_i32_0 : i32, i32
  }
  func.func @transform_4(%arg0: i32) -> (i32, i32) {
    %c0_i32 = arith.constant 0 : i32
    %c0_i32_0 = arith.constant 0 : i32
    %c0_i32_1 = arith.constant 0 : i32
    return %c0_i32, %c0_i32_0 : i32, i32
  }
  func.func @transform_5(%arg0: i32) -> (i32, i32) {
    %c0_i32 = arith.constant 0 : i32
    %c0_i32_0 = arith.constant 0 : i32
    return %arg0, %c0_i32 : i32, i32
  }
}

</mosaic_0001>

<llo_original>
// kernel: tpu_custom_call.1
$region0: #{tpu_custom_call.1}
  #allocation0 [shape = 'u32[]', space=smem, size = 0x4, offset = 0x4, fixed_abs, tag = 'smem constant byte address 0x4 - core index']
  #allocation1 [shape = 'u32[144,128]{1,0:T(1,128)}', space=vmem, size = 0x12000, scoped, tag = 'internal scratch']
  %s0 = inlined_call_operand.vmem [shape: f32[1,512], index: 0, kind: input, shape index: {}]
  %s1 = inlined_call_operand.vmem [shape: f32[512,320], index: 1, kind: input, shape index: {}]
  %s2 = inlined_call_operand.vmem [shape: f32[1,320], index: 2, kind: input, shape index: {}]
  %s3 = inlined_call_operand.vmem [shape: f32[320,128], index: 3, kind: input, shape index: {}]
  %s4 = inlined_call_operand.vmem [shape: f32[1,128], index: 4, kind: input, shape index: {}]
  %s5 = inlined_call_operand.hbm [shape: f32[1,128], index: 5, kind: output, shape index: {}]
  %s6 = sld [smem:[#allocation0]]
  $region30: #{tpu_custom_call.1} parent=0
    _
  %s8 = ssub.s32 1, %s6
  %s9 = scalar_select 0, %s8, %s6
  $region1: #{tpu_custom_call.1} parent=0
    #allocation2 [shape = 'u8[512]{0}', space=vmem, size = 0x400, scoped, tag = 'output window, operand 0, single buffered']
    #allocation3 [shape = 's32[1]{0}', space=sflag, size = 0x4, scoped, tag = 'scoped memory for tpu_custom_call.1']
    %10 = vsyncpa [#allocation3], 0
    // Predicated region
    $region2: #{tpu_custom_call.1} parent=1 // pred_check
      _
    $region3: #{tpu_custom_call.1} parent=1 // pred_check_branch
      %12 = sbr.rel (0) target = $region5
    $region4: #{tpu_custom_call.1} parent=1 // pred_region
      _
    $region5: #{tpu_custom_call.1} parent=1 // pred_fallthru
      _
    // Predicated region
    $region6: #{tpu_custom_call.1} parent=1 // pred_check
      _
    $region7: #{tpu_custom_call.1} parent=1 // pred_check_branch
      %14 = sbr.rel (0) target = $region9
    $region8: #{tpu_custom_call.1} parent=1 // pred_region
      _
    $region9: #{tpu_custom_call.1} parent=1 // pred_fallthru
      _
    // Predicated region
    $region10: #{tpu_custom_call.1} parent=1 // pred_check
      _
    $region11: #{tpu_custom_call.1} parent=1 // pred_check_branch
      %16 = sbr.rel (0) target = $region13
    $region12: #{tpu_custom_call.1} parent=1 // pred_region
      _
    $region13: #{tpu_custom_call.1} parent=1 // pred_fallthru
      _
    // Predicated region
    $region14: #{tpu_custom_call.1} parent=1 // pred_check
      _
    $region15: #{tpu_custom_call.1} parent=1 // pred_check_branch
      %18 = sbr.rel (0) target = $region17
    $region16: #{tpu_custom_call.1} parent=1 // pred_region
      _
    $region17: #{tpu_custom_call.1} parent=1 // pred_fallthru
      _
    // Predicated region
    $region18: #{tpu_custom_call.1} parent=1 // pred_check
      _
    $region19: #{tpu_custom_call.1} parent=1 // pred_check_branch
      %20 = sbr.rel (0) target = $region21
    $region20: #{tpu_custom_call.1} parent=1 // pred_region
      _
    $region21: #{tpu_custom_call.1} parent=1 // pred_fallthru
      _
    %v21 = vld [vmem:[%s0] sm:$0xf]
    %v22 = vld [vmem:[%s1] sm:$0xff]
    %v23 = vld [vmem:[%s1 + $0x8] sm:$0xff]
    %v24 = vld [vmem:[%s1 + $0x10] sm:$0xff]
    %v25 = vld [vmem:[%s1 + $0x18] sm:$0xff]
    %v26 = vld [vmem:[%s1 + $0x20] sm:$0xff]
    %v27 = vld [vmem:[%s1 + $0x28] sm:$0xff]
    %v28 = vld [vmem:[%s1 + $0x30] sm:$0xff]
    %v29 = vld [vmem:[%s1 + $0x38] sm:$0xff]
    %v30 = vld [vmem:[%s1 + $0x40] sm:$0xff]
    %v31 = vld [vmem:[%s1 + $0x48] sm:$0xff]
    %v32 = vld [vmem:[%s1 + $0x50] sm:$0xff]
    %v33 = vld [vmem:[%s1 + $0x58] sm:$0xff]
    %v34 = vld [vmem:[%s1 + $0x60] sm:$0xff]
    %v35 = vld [vmem:[%s1 + $0x68] sm:$0xff]
    %v36 = vld [vmem:[%s1 + $0x70] sm:$0xff]
    %v37 = vld [vmem:[%s1 + $0x78] sm:$0xff]
    %v38 = vld [vmem:[%s1 + $0x80] sm:$0xff]
    %v39 = vld [vmem:[%s1 + $0x88] sm:$0xff]
    %v40 = vld [vmem:[%s1 + $0x90] sm:$0xff]
    %v41 = vld [vmem:[%s1 + $0x98] sm:$0xff]
    %v42 = vld [vmem:[%s1 + $0xa0] sm:$0xff]
    %v43 = vld [vmem:[%s1 + $0xa8] sm:$0xff]
    %v44 = vld [vmem:[%s1 + $0xb0] sm:$0xff]
    %v45 = vld [vmem:[%s1 + $0xb8] sm:$0xff]
    %v46 = vld [vmem:[%s1 + $0xc0] sm:$0xff]
    %v47 = vld [vmem:[%s1 + $0xc8] sm:$0xff]
    %v48 = vld [vmem:[%s1 + $0xd0] sm:$0xff]
    %v49 = vld [vmem:[%s1 + $0xd8] sm:$0xff]
    %v50 = vld [vmem:[%s1 + $0xe0] sm:$0xff]
    %v51 = vld [vmem:[%s1 + $0xe8] sm:$0xff]
    %v52 = vld [vmem:[%s1 + $0xf0] sm:$0xff]
    %v53 = vld [vmem:[%s1 + $0xf8] sm:$0xff]
    %v54 = vld [vmem:[%s1 + $0x100] sm:$0xff]
    %v55 = vld [vmem:[%s1 + $0x108] sm:$0xff]
    %v56 = vld [vmem:[%s1 + $0x110] sm:$0xff]
    %v57 = vld [vmem:[%s1 + $0x118] sm:$0xff]
    %v58 = vld [vmem:[%s1 + $0x120] sm:$0xff]
    %v59 = vld [vmem:[%s1 + $0x128] sm:$0xff]
    %v60 = vld [vmem:[%s1 + $0x130] sm:$0xff]
    %v61 = vld [vmem:[%s1 + $0x138] sm:$0xff]
    %v62 = vld [vmem:[%s1 + $0x140] sm:$0xff]
    %v63 = vld [vmem:[%s1 + $0x148] sm:$0xff]
    %v64 = vld [vmem:[%s1 + $0x150] sm:$0xff]
    %v65 = vld [vmem:[%s1 + $0x158] sm:$0xff]
    %v66 = vld [vmem:[%s1 + $0x160] sm:$0xff]
    %v67 = vld [vmem:[%s1 + $0x168] sm:$0xff]
    %v68 = vld [vmem:[%s1 + $0x170] sm:$0xff]
    %v69 = vld [vmem:[%s1 + $0x178] sm:$0xff]
    %v70 = vld [vmem:[%s1 + $0x180] sm:$0xff]
    %v71 = vld [vmem:[%s1 + $0x188] sm:$0xff]
    %v72 = vld [vmem:[%s1 + $0x190] sm:$0xff]
    %v73 = vld [vmem:[%s1 + $0x198] sm:$0xff]
    %v74 = vld [vmem:[%s1 + $0x1a0] sm:$0xff]
    %v75 = vld [vmem:[%s1 + $0x1a8] sm:$0xff]
    %v76 = vld [vmem:[%s1 + $0x1b0] sm:$0xff]
    %v77 = vld [vmem:[%s1 + $0x1b8] sm:$0xff]
    %v78 = vld [vmem:[%s1 + $0x1c0] sm:$0xff]
    %v79 = vld [vmem:[%s1 + $0x1c8] sm:$0xff]
    %v80 = vld [vmem:[%s1 + $0x1d0] sm:$0xff]
    %v81 = vld [vmem:[%s1 + $0x1d8] sm:$0xff]
    %v82 = vld [vmem:[%s1 + $0x1e0] sm:$0xff]
    %v83 = vld [vmem:[%s1 + $0x1e8] sm:$0xff]
    %v84 = vld [vmem:[%s1 + $0x1f0] sm:$0xff]
    %v85 = vld [vmem:[%s1 + $0x1f8] sm:$0xff]
    %v86 = vld [vmem:[%s1 + $0x200] sm:$0xff]
    %v87 = vld [vmem:[%s1 + $0x208] sm:$0xff]
    %v88 = vld [vmem:[%s1 + $0x210] sm:$0xff]
    %v89 = vld [vmem:[%s1 + $0x218] sm:$0xff]
    %v90 = vld [vmem:[%s1 + $0x220] sm:$0xff]
    %v91 = vld [vmem:[%s1 + $0x228] sm:$0xff]
    %v92 = vld [vmem:[%s1 + $0x230] sm:$0xff]
    %v93 = vld [vmem:[%s1 + $0x238] sm:$0xff]
    %v94 = vld [vmem:[%s1 + $0x240] sm:$0xff]
    %v95 = vld [vmem:[%s1 + $0x248] sm:$0xff]
    %v96 = vld [vmem:[%s1 + $0x250] sm:$0xff]
    %v97 = vld [vmem:[%s1 + $0x258] sm:$0xff]
    %v98 = vld [vmem:[%s1 + $0x260] sm:$0xff]
    %v99 = vld [vmem:[%s1 + $0x268] sm:$0xff]
    %v100 = vld [vmem:[%s1 + $0x270] sm:$0xff]
    %v101 = vld [vmem:[%s1 + $0x278] sm:$0xff]
    %v102 = vld [vmem:[%s1 + $0x280] sm:$0xff]
    %v103 = vld [vmem:[%s1 + $0x288] sm:$0xff]
    %v104 = vld [vmem:[%s1 + $0x290] sm:$0xff]
    %v105 = vld [vmem:[%s1 + $0x298] sm:$0xff]
    %v106 = vld [vmem:[%s1 + $0x2a0] sm:$0xff]
    %v107 = vld [vmem:[%s1 + $0x2a8] sm:$0xff]
    %v108 = vld [vmem:[%s1 + $0x2b0] sm:$0xff]
    %v109 = vld [vmem:[%s1 + $0x2b8] sm:$0xff]
    %v110 = vld [vmem:[%s1 + $0x2c0] sm:$0xff]
    %v111 = vld [vmem:[%s1 + $0x2c8] sm:$0xff]
    %v112 = vld [vmem:[%s1 + $0x2d0] sm:$0xff]
    %v113 = vld [vmem:[%s1 + $0x2d8] sm:$0xff]
    %v114 = vld [vmem:[%s1 + $0x2e0] sm:$0xff]
    %v115 = vld [vmem:[%s1 + $0x2e8] sm:$0xff]
    %v116 = vld [vmem:[%s1 + $0x2f0] sm:$0xff]
    %v117 = vld [vmem:[%s1 + $0x2f8] sm:$0xff]
    %v118 = vld [vmem:[%s1 + $0x300] sm:$0xff]
    %v119 = vld [vmem:[%s1 + $0x308] sm:$0xff]
    %v120 = vld [vmem:[%s1 + $0x310] sm:$0xff]
    %v121 = vld [vmem:[%s1 + $0x318] sm:$0xff]
    %v122 = vld [vmem:[%s1 + $0x320] sm:$0xff]
    %v123 = vld [vmem:[%s1 + $0x328] sm:$0xff]
    %v124 = vld [vmem:[%s1 + $0x330] sm:$0xff]
    %v125 = vld [vmem:[%s1 + $0x338] sm:$0xff]
    %v126 = vld [vmem:[%s1 + $0x340] sm:$0xff]
    %v127 = vld [vmem:[%s1 + $0x348] sm:$0xff]
    %v128 = vld [vmem:[%s1 + $0x350] sm:$0xff]
    %v129 = vld [vmem:[%s1 + $0x358] sm:$0xff]
    %v130 = vld [vmem:[%s1 + $0x360] sm:$0xff]
    %v131 = vld [vmem:[%s1 + $0x368] sm:$0xff]
    %v132 = vld [vmem:[%s1 + $0x370] sm:$0xff]
    %v133 = vld [vmem:[%s1 + $0x378] sm:$0xff]
    %v134 = vld [vmem:[%s1 + $0x380] sm:$0xff]
    %v135 = vld [vmem:[%s1 + $0x388] sm:$0xff]
    %v136 = vld [vmem:[%s1 + $0x390] sm:$0xff]
    %v137 = vld [vmem:[%s1 + $0x398] sm:$0xff]
    %v138 = vld [vmem:[%s1 + $0x3a0] sm:$0xff]
    %v139 = vld [vmem:[%s1 + $0x3a8] sm:$0xff]
    %v140 = vld [vmem:[%s1 + $0x3b0] sm:$0xff]
    %v141 = vld [vmem:[%s1 + $0x3b8] sm:$0xff]
    %v142 = vld [vmem:[%s1 + $0x3c0] sm:$0xff]
    %v143 = vld [vmem:[%s1 + $0x3c8] sm:$0xff]
    %v144 = vld [vmem:[%s1 + $0x3d0] sm:$0xff]
    %v145 = vld [vmem:[%s1 + $0x3d8] sm:$0xff]
    %v146 = vld [vmem:[%s1 + $0x3e0] sm:$0xff]
    %v147 = vld [vmem:[%s1 + $0x3e8] sm:$0xff]
    %v148 = vld [vmem:[%s1 + $0x3f0] sm:$0xff]
    %v149 = vld [vmem:[%s1 + $0x3f8] sm:$0xff]
    %v150 = vld [vmem:[%s1 + $0x400] sm:$0xff]
    %v151 = vld [vmem:[%s1 + $0x408] sm:$0xff]
    %v152 = vld [vmem:[%s1 + $0x410] sm:$0xff]
    %v153 = vld [vmem:[%s1 + $0x418] sm:$0xff]
    %v154 = vld [vmem:[%s1 + $0x420] sm:$0xff]
    %v155 = vld [vmem:[%s1 + $0x428] sm:$0xff]
    %v156 = vld [vmem:[%s1 + $0x430] sm:$0xff]
    %v157 = vld [vmem:[%s1 + $0x438] sm:$0xff]
    %v158 = vld [vmem:[%s1 + $0x440] sm:$0xff]
    %v159 = vld [vmem:[%s1 + $0x448] sm:$0xff]
    %v160 = vld [vmem:[%s1 + $0x450] sm:$0xff]
    %v161 = vld [vmem:[%s1 + $0x458] sm:$0xff]
    %v162 = vld [vmem:[%s1 + $0x460] sm:$0xff]
    %v163 = vld [vmem:[%s1 + $0x468] sm:$0xff]
    %v164 = vld [vmem:[%s1 + $0x470] sm:$0xff]
    %v165 = vld [vmem:[%s1 + $0x478] sm:$0xff]
    %v166 = vld [vmem:[%s1 + $0x480] sm:$0xff]
    %v167 = vld [vmem:[%s1 + $0x488] sm:$0xff]
    %v168 = vld [vmem:[%s1 + $0x490] sm:$0xff]
    %v169 = vld [vmem:[%s1 + $0x498] sm:$0xff]
    %v170 = vld [vmem:[%s1 + $0x4a0] sm:$0xff]
    %v171 = vld [vmem:[%s1 + $0x4a8] sm:$0xff]
    %v172 = vld [vmem:[%s1 + $0x4b0] sm:$0xff]
    %v173 = vld [vmem:[%s1 + $0x4b8] sm:$0xff]
    %v174 = vld [vmem:[%s1 + $0x4c0] sm:$0xff]
    %v175 = vld [vmem:[%s1 + $0x4c8] sm:$0xff]
    %v176 = vld [vmem:[%s1 + $0x4d0] sm:$0xff]
    %v177 = vld [vmem:[%s1 + $0x4d8] sm:$0xff]
    %v178 = vld [vmem:[%s1 + $0x4e0] sm:$0xff]
    %v179 = vld [vmem:[%s1 + $0x4e8] sm:$0xff]
    %v180 = vld [vmem:[%s1 + $0x4f0] sm:$0xff]
    %v181 = vld [vmem:[%s1 + $0x4f8] sm:$0xff]
    %v182 = vld [vmem:[%s1 + $0x500] sm:$0xff]
    %v183 = vld [vmem:[%s1 + $0x508] sm:$0xff]
    %v184 = vld [vmem:[%s1 + $0x510] sm:$0xff]
    %v185 = vld [vmem:[%s1 + $0x518] sm:$0xff]
    %v186 = vld [vmem:[%s1 + $0x520] sm:$0xff]
    %v187 = vld [vmem:[%s1 + $0x528] sm:$0xff]
    %v188 = vld [vmem:[%s1 + $0x530] sm:$0xff]
    %v189 = vld [vmem:[%s1 + $0x538] sm:$0xff]
    %v190 = vld [vmem:[%s1 + $0x540] sm:$0xff]
    %v191 = vld [vmem:[%s1 + $0x548] sm:$0xff]
    %v192 = vld [vmem:[%s1 + $0x550] sm:$0xff]
    %v193 = vld [vmem:[%s1 + $0x558] sm:$0xff]
    %v194 = vld [vmem:[%s1 + $0x560] sm:$0xff]
    %v195 = vld [vmem:[%s1 + $0x568] sm:$0xff]
    %v196 = vld [vmem:[%s1 + $0x570] sm:$0xff]
    %v197 = vld [vmem:[%s1 + $0x578] sm:$0xff]
    %v198 = vld [vmem:[%s1 + $0x580] sm:$0xff]
    %v199 = vld [vmem:[%s1 + $0x588] sm:$0xff]
    %v200 = vld [vmem:[%s1 + $0x590] sm:$0xff]
    %v201 = vld [vmem:[%s1 + $0x598] sm:$0xff]
    %v202 = vld [vmem:[%s1 + $0x5a0] sm:$0xff]
    %v203 = vld [vmem:[%s1 + $0x5a8] sm:$0xff]
    %v204 = vld [vmem:[%s1 + $0x5b0] sm:$0xff]
    %v205 = vld [vmem:[%s1 + $0x5b8] sm:$0xff]
    %v206 = vld [vmem:[%s1 + $0x5c0] sm:$0xff]
    %v207 = vld [vmem:[%s1 + $0x5c8] sm:$0xff]
    %v208 = vld [vmem:[%s1 + $0x5d0] sm:$0xff]
    %v209 = vld [vmem:[%s1 + $0x5d8] sm:$0xff]
    %v210 = vld [vmem:[%s1 + $0x5e0] sm:$0xff]
    %v211 = vld [vmem:[%s1 + $0x5e8] sm:$0xff]
    %v212 = vld [vmem:[%s1 + $0x5f0] sm:$0xff]
    %v213 = vld [vmem:[%s1 + $0x5f8] sm:$0xff]
    %v214 = vld [vmem:[%s2] sm:$0x7]
    %v216 = vlaneseq
    %v217 = vshrl.u32 %v216, 7
    %v218 = vsub.s32 0, %v217
    %v219 = vrot.slane %v21, %v218
    %v220 = vlaneseq
    %v221 = vshrl.u32 %v220, 7
    %v222 = vsub.s32 1, %v221
    %v223 = vrot.slane %v21, %v222
    %v224 = vlaneseq
    %v225 = vshrl.u32 %v224, 7
    %v226 = vsub.s32 2, %v225
    %v227 = vrot.slane %v21, %v226
    %v228 = vlaneseq
    %v229 = vshrl.u32 %v228, 7
    %v230 = vsub.s32 3, %v229
    %v231 = vrot.slane %v21, %v230
    %v237 = vlaneseq
    %v238 = vshrl.u32 %v237, 7
    %v239 = vsub.s32 0, %v238
    %v240 = vrot.slane %v214, %v239
    %v241 = vlaneseq
    %v242 = vshrl.u32 %v241, 7
    %v243 = vsub.s32 1, %v242
    %v244 = vrot.slane %v214, %v243
    %v245 = vlaneseq
    %v246 = vshrl.u32 %v245, 7
    %v247 = vsub.s32 2, %v246
    %v248 = vrot.slane %v214, %v247
    %252 = vmatprep.subr.mxu0 %v68
    %253 = vmatpush1.msra.mxu0 %v67
    %254 = vmatprep.subr.mxu0 %v65
    %255 = vmatpush1.msra.mxu0 %v64
    %256 = vmatprep.subr.mxu0 %v62
    %257 = vmatpush1.msra.mxu0 %v61
    %258 = vmatprep.subr.mxu0 %v59
    %259 = vmatpush1.msra.mxu0 %v58
    %260 = vmatprep.subr.mxu0 %v56
    %261 = vmatpush1.msra.mxu0 %v55
    %262 = vmatprep.subr.mxu0 %v53
    %263 = vmatpush1.msra.mxu0 %v52
    %264 = vmatprep.subr.mxu0 %v50
    %265 = vmatpush1.msra.mxu0 %v49
    %266 = vmatprep.subr.mxu0 %v47
    %267 = vmatpush1.msra.mxu0 %v46
    %268 = vmatprep.subr.mxu0 %v44
    %269 = vmatpush1.msra.mxu0 %v43
    %270 = vmatprep.subr.mxu0 %v41
    %271 = vmatpush1.msra.mxu0 %v40
    %272 = vmatprep.subr.mxu0 %v38
    %273 = vmatpush1.msra.mxu0 %v37
    %274 = vmatprep.subr.mxu0 %v35
    %275 = vmatpush1.msra.mxu0 %v34
    %276 = vmatprep.subr.mxu0 %v32
    %277 = vmatpush1.msra.mxu0 %v31
    %278 = vmatprep.subr.mxu0 %v29
    %279 = vmatpush1.msra.mxu0 %v28
    %280 = vmatprep.subr.mxu0 %v26
    %281 = vmatpush1.msra.mxu0 %v25
    %282 = vmatprep.subr.mxu0 %v23
    %283 = vmatpush1.msra.mxu0 %v22
    %284 = vmatprep.subr.mxu0 %v116
    %285 = vmatpush2.msra.mxu0 %v115
    %286 = vmatprep.subr.mxu0 %v113
    %287 = vmatpush2.msra.mxu0 %v112
    %288 = vmatprep.subr.mxu0 %v110
    %289 = vmatpush2.msra.mxu0 %v109
    %290 = vmatprep.subr.mxu0 %v107
    %291 = vmatpush2.msra.mxu0 %v106
    %292 = vmatprep.subr.mxu0 %v104
    %293 = vmatpush2.msra.mxu0 %v103
    %294 = vmatprep.subr.mxu0 %v101
    %295 = vmatpush2.msra.mxu0 %v100
    %296 = vmatprep.subr.mxu0 %v98
    %297 = vmatpush2.msra.mxu0 %v97
    %298 = vmatprep.subr.mxu0 %v95
    %299 = vmatpush2.msra.mxu0 %v94
    %300 = vmatprep.subr.mxu0 %v92
    %301 = vmatpush2.msra.mxu0 %v91
    %302 = vmatprep.subr.mxu0 %v89
    %303 = vmatpush2.msra.mxu0 %v88
    %304 = vmatprep.subr.mxu0 %v86
    %305 = vmatpush2.msra.mxu0 %v85
    %306 = vmatprep.subr.mxu0 %v83
    %307 = vmatpush2.msra.mxu0 %v82
    %308 = vmatprep.subr.mxu0 %v80
    %309 = vmatpush2.msra.mxu0 %v79
    %310 = vmatprep.subr.mxu0 %v77
    %311 = vmatpush2.msra.mxu0 %v76
    %312 = vmatprep.subr.mxu0 %v74
    %313 = vmatpush2.msra.mxu0 %v73
    %314 = vmatprep.subr.mxu0 %v71
    %315 = vmatpush2.msra.mxu0 %v70
    %316 = vmatprep.mubr.f32.mxu0 %v223
    %317 = vmatmul.mubr.f32.gmra.mxu0 %v219
    %v318 = vpop.f32.mrf.mxu0
    %v319 = vadd.f32 %v240, %v318
    %v320 = vpop.f32.mrf.mxu0
    %v321 = vadd.f32 %v244, %v320
    %322 = vdwg.mxu0
    %323 = vmatprep.subr.mxu0 %v164
    %324 = vmatpush1.msra.mxu0 %v163
    %325 = vmatprep.subr.mxu0 %v161
    %326 = vmatpush1.msra.mxu0 %v160
    %327 = vmatprep.subr.mxu0 %v158
    %328 = vmatpush1.msra.mxu0 %v157
    %329 = vmatprep.subr.mxu0 %v155
    %330 = vmatpush1.msra.mxu0 %v154
    %331 = vmatprep.subr.mxu0 %v152
    %332 = vmatpush1.msra.mxu0 %v151
    %333 = vmatprep.subr.mxu0 %v149
    %334 = vmatpush1.msra.mxu0 %v148
    %335 = vmatprep.subr.mxu0 %v146
    %336 = vmatpush1.msra.mxu0 %v145
    %337 = vmatprep.subr.mxu0 %v143
    %338 = vmatpush1.msra.mxu0 %v142
    %339 = vmatprep.subr.mxu0 %v140
    %340 = vmatpush1.msra.mxu0 %v139
    %341 = vmatprep.subr.mxu0 %v137
    %342 = vmatpush1.msra.mxu0 %v136
    %343 = vmatprep.subr.mxu0 %v134
    %344 = vmatpush1.msra.mxu0 %v133
    %345 = vmatprep.subr.mxu0 %v131
    %346 = vmatpush1.msra.mxu0 %v130
    %347 = vmatprep.subr.mxu0 %v128
    %348 = vmatpush1.msra.mxu0 %v127
    %349 = vmatprep.subr.mxu0 %v125
    %350 = vmatpush1.msra.mxu0 %v124
    %351 = vmatprep.subr.mxu0 %v122
    %352 = vmatpush1.msra.mxu0 %v121
    %353 = vmatprep.subr.mxu0 %v119
    %354 = vmatpush1.msra.mxu0 %v118
    %355 = vmatprep.subr.mxu0 %v212
    %356 = vmatpush2.msra.mxu0 %v211
    %357 = vmatprep.subr.mxu0 %v209
    %358 = vmatpush2.msra.mxu0 %v208
    %359 = vmatprep.subr.mxu0 %v206
    %360 = vmatpush2.msra.mxu0 %v205
    %361 = vmatprep.subr.mxu0 %v203
    %362 = vmatpush2.msra.mxu0 %v202
    %363 = vmatprep.subr.mxu0 %v200
    %364 = vmatpush2.msra.mxu0 %v199
    %365 = vmatprep.subr.mxu0 %v197
    %366 = vmatpush2.msra.mxu0 %v196
    %367 = vmatprep.subr.mxu0 %v194
    %368 = vmatpush2.msra.mxu0 %v193
    %369 = vmatprep.subr.mxu0 %v191
    %370 = vmatpush2.msra.mxu0 %v190
    %371 = vmatprep.subr.mxu0 %v188
    %372 = vmatpush2.msra.mxu0 %v187
    %373 = vmatprep.subr.mxu0 %v185
    %374 = vmatpush2.msra.mxu0 %v184
    %375 = vmatprep.subr.mxu0 %v182
    %376 = vmatpush2.msra.mxu0 %v181
    %377 = vmatprep.subr.mxu0 %v179
    %378 = vmatpush2.msra.mxu0 %v178
    %379 = vmatprep.subr.mxu0 %v176
    %380 = vmatpush2.msra.mxu0 %v175
    %381 = vmatprep.subr.mxu0 %v173
    %382 = vmatpush2.msra.mxu0 %v172
    %383 = vmatprep.subr.mxu0 %v170
    %384 = vmatpush2.msra.mxu0 %v169
    %385 = vmatprep.subr.mxu0 %v167
    %386 = vmatpush2.msra.mxu0 %v166
    %387 = vmatprep.mubr.f32.mxu0 %v231
    %388 = vmatmul.mubr.f32.gmra.mxu0 %v227
    %v389 = vpop.f32.mrf.mxu0
    %v390 = vadd.f32 %v319, %v389
    %v391 = vpop.f32.mrf.mxu0
    %v392 = vadd.f32 %v321, %v391
    %393 = vdwg.mxu0
    %394 = vmatprep.subr.mxu0 0.0
    %395 = vmatpush1.msra.mxu0 %v69
    %396 = vmatprep.subr.mxu0 0.0
    %397 = vmatpush1.msra.mxu0 %v66
    %398 = vmatprep.subr.mxu0 0.0
    %399 = vmatpush1.msra.mxu0 %v63
    %400 = vmatprep.subr.mxu0 0.0
    %401 = vmatpush1.msra.mxu0 %v60
    %402 = vmatprep.subr.mxu0 0.0
    %403 = vmatpush1.msra.mxu0 %v57
    %404 = vmatprep.subr.mxu0 0.0
    %405 = vmatpush1.msra.mxu0 %v54
    %406 = vmatprep.subr.mxu0 0.0
    %407 = vmatpush1.msra.mxu0 %v51
    %408 = vmatprep.subr.mxu0 0.0
    %409 = vmatpush1.msra.mxu0 %v48
    %410 = vmatprep.subr.mxu0 0.0
    %411 = vmatpush1.msra.mxu0 %v45
    %412 = vmatprep.subr.mxu0 0.0
    %413 = vmatpush1.msra.mxu0 %v42
    %414 = vmatprep.subr.mxu0 0.0
    %415 = vmatpush1.msra.mxu0 %v39
    %416 = vmatprep.subr.mxu0 0.0
    %417 = vmatpush1.msra.mxu0 %v36
    %418 = vmatprep.subr.mxu0 0.0
    %419 = vmatpush1.msra.mxu0 %v33
    %420 = vmatprep.subr.mxu0 0.0
    %421 = vmatpush1.msra.mxu0 %v30
    %422 = vmatprep.subr.mxu0 0.0
    %423 = vmatpush1.msra.mxu0 %v27
    %424 = vmatprep.subr.mxu0 0.0
    %425 = vmatpush1.msra.mxu0 %v24
    %426 = vmatprep.subr.mxu0 0.0
    %427 = vmatpush2.msra.mxu0 %v117
    %428 = vmatprep.subr.mxu0 0.0
    %429 = vmatpush2.msra.mxu0 %v114
    %430 = vmatprep.subr.mxu0 0.0
    %431 = vmatpush2.msra.mxu0 %v111
    %432 = vmatprep.subr.mxu0 0.0
    %433 = vmatpush2.msra.mxu0 %v108
    %434 = vmatprep.subr.mxu0 0.0
    %435 = vmatpush2.msra.mxu0 %v105
    %436 = vmatprep.subr.mxu0 0.0
    %437 = vmatpush2.msra.mxu0 %v102
    %438 = vmatprep.subr.mxu0 0.0
    %439 = vmatpush2.msra.mxu0 %v99
    %440 = vmatprep.subr.mxu0 0.0
    %441 = vmatpush2.msra.mxu0 %v96
    %442 = vmatprep.subr.mxu0 0.0
    %443 = vmatpush2.msra.mxu0 %v93
    %444 = vmatprep.subr.mxu0 0.0
    %445 = vmatpush2.msra.mxu0 %v90
    %446 = vmatprep.subr.mxu0 0.0
    %447 = vmatpush2.msra.mxu0 %v87
    %448 = vmatprep.subr.mxu0 0.0
    %449 = vmatpush2.msra.mxu0 %v84
    %450 = vmatprep.subr.mxu0 0.0
    %451 = vmatpush2.msra.mxu0 %v81
    %452 = vmatprep.subr.mxu0 0.0
    %453 = vmatpush2.msra.mxu0 %v78
    %454 = vmatprep.subr.mxu0 0.0
    %455 = vmatpush2.msra.mxu0 %v75
    %456 = vmatprep.subr.mxu0 0.0
    %457 = vmatpush2.msra.mxu0 %v72
    %458 = vmatprep.mubr.f32.mxu0 %v223
    %459 = vmatmul.mubr.f32.gmra.mxu0 %v219
    %v460 = vpop.f32.mrf.mxu0
    %v461 = vadd.f32 %v248, %v460
    %v462 = vpop.f32.mrf.mxu0
    %463 = vdwg.mxu0
    %464 = vmatprep.subr.mxu0 0.0
    %465 = vmatpush1.msra.mxu0 %v165
    %466 = vmatprep.subr.mxu0 0.0
    %467 = vmatpush1.msra.mxu0 %v162
    %468 = vmatprep.subr.mxu0 0.0
    %469 = vmatpush1.msra.mxu0 %v159
    %470 = vmatprep.subr.mxu0 0.0
    %471 = vmatpush1.msra.mxu0 %v156
    %472 = vmatprep.subr.mxu0 0.0
    %473 = vmatpush1.msra.mxu0 %v153
    %474 = vmatprep.subr.mxu0 0.0
    %475 = vmatpush1.msra.mxu0 %v150
    %476 = vmatprep.subr.mxu0 0.0
    %477 = vmatpush1.msra.mxu0 %v147
    %478 = vmatprep.subr.mxu0 0.0
    %479 = vmatpush1.msra.mxu0 %v144
    %480 = vmatprep.subr.mxu0 0.0
    %481 = vmatpush1.msra.mxu0 %v141
    %482 = vmatprep.subr.mxu0 0.0
    %483 = vmatpush1.msra.mxu0 %v138
    %484 = vmatprep.subr.mxu0 0.0
    %485 = vmatpush1.msra.mxu0 %v135
    %486 = vmatprep.subr.mxu0 0.0
    %487 = vmatpush1.msra.mxu0 %v132
    %488 = vmatprep.subr.mxu0 0.0
    %489 = vmatpush1.msra.mxu0 %v129
    %490 = vmatprep.subr.mxu0 0.0
    %491 = vmatpush1.msra.mxu0 %v126
    %492 = vmatprep.subr.mxu0 0.0
    %493 = vmatpush1.msra.mxu0 %v123
    %494 = vmatprep.subr.mxu0 0.0
    %495 = vmatpush1.msra.mxu0 %v120
    %496 = vmatprep.subr.mxu0 0.0
    %497 = vmatpush2.msra.mxu0 %v213
    %498 = vmatprep.subr.mxu0 0.0
    %499 = vmatpush2.msra.mxu0 %v210
    %500 = vmatprep.subr.mxu0 0.0
    %501 = vmatpush2.msra.mxu0 %v207
    %502 = vmatprep.subr.mxu0 0.0
    %503 = vmatpush2.msra.mxu0 %v204
    %504 = vmatprep.subr.mxu0 0.0
    %505 = vmatpush2.msra.mxu0 %v201
    %506 = vmatprep.subr.mxu0 0.0
    %507 = vmatpush2.msra.mxu0 %v198
    %508 = vmatprep.subr.mxu0 0.0
    %509 = vmatpush2.msra.mxu0 %v195
    %510 = vmatprep.subr.mxu0 0.0
    %511 = vmatpush2.msra.mxu0 %v192
    %512 = vmatprep.subr.mxu0 0.0
    %513 = vmatpush2.msra.mxu0 %v189
    %514 = vmatprep.subr.mxu0 0.0
    %515 = vmatpush2.msra.mxu0 %v186
    %516 = vmatprep.subr.mxu0 0.0
    %517 = vmatpush2.msra.mxu0 %v183
    %518 = vmatprep.subr.mxu0 0.0
    %519 = vmatpush2.msra.mxu0 %v180
    %520 = vmatprep.subr.mxu0 0.0
    %521 = vmatpush2.msra.mxu0 %v177
    %522 = vmatprep.subr.mxu0 0.0
    %523 = vmatpush2.msra.mxu0 %v174
    %524 = vmatprep.subr.mxu0 0.0
    %525 = vmatpush2.msra.mxu0 %v171
    %526 = vmatprep.subr.mxu0 0.0
    %527 = vmatpush2.msra.mxu0 %v168
    %528 = vmatprep.mubr.f32.mxu0 %v231
    %529 = vmatmul.mubr.f32.gmra.mxu0 %v227
    %v530 = vpop.f32.mrf.mxu0
    %v531 = vadd.f32 %v461, %v530
    %v532 = vpop.f32.mrf.mxu0
    %533 = vdwg.mxu0
    %v534 = vmax.f32 %v390, 0.0
    %v535 = vmax.f32 %v392, 0.0
    %v536 = vmax.f32 %v531, 0.0
    %v537 = vld [vmem:[%s3] sm:$0xff]
    %v538 = vld [vmem:[%s3 + $0x8] sm:$0xff]
    %v539 = vld [vmem:[%s3 + $0x10] sm:$0xff]
    %v540 = vld [vmem:[%s3 + $0x18] sm:$0xff]
    %v541 = vld [vmem:[%s3 + $0x20] sm:$0xff]
    %v542 = vld [vmem:[%s3 + $0x28] sm:$0xff]
    %v543 = vld [vmem:[%s3 + $0x30] sm:$0xff]
    %v544 = vld [vmem:[%s3 + $0x38] sm:$0xff]
    %v545 = vld [vmem:[%s3 + $0x40] sm:$0xff]
    %v546 = vld [vmem:[%s3 + $0x48] sm:$0xff]
    %v547 = vld [vmem:[%s3 + $0x50] sm:$0xff]
    %v548 = vld [vmem:[%s3 + $0x58] sm:$0xff]
    %v549 = vld [vmem:[%s3 + $0x60] sm:$0xff]
    %v550 = vld [vmem:[%s3 + $0x68] sm:$0xff]
    %v551 = vld [vmem:[%s3 + $0x70] sm:$0xff]
    %v552 = vld [vmem:[%s3 + $0x78] sm:$0xff]
    %v553 = vld [vmem:[%s3 + $0x80] sm:$0xff]
    %v554 = vld [vmem:[%s3 + $0x88] sm:$0xff]
    %v555 = vld [vmem:[%s3 + $0x90] sm:$0xff]
    %v556 = vld [vmem:[%s3 + $0x98] sm:$0xff]
    %v557 = vld [vmem:[%s3 + $0xa0] sm:$0xff]
    %v558 = vld [vmem:[%s3 + $0xa8] sm:$0xff]
    %v559 = vld [vmem:[%s3 + $0xb0] sm:$0xff]
    %v560 = vld [vmem:[%s3 + $0xb8] sm:$0xff]
    %v561 = vld [vmem:[%s3 + $0xc0] sm:$0xff]
    %v562 = vld [vmem:[%s3 + $0xc8] sm:$0xff]
    %v563 = vld [vmem:[%s3 + $0xd0] sm:$0xff]
    %v564 = vld [vmem:[%s3 + $0xd8] sm:$0xff]
    %v565 = vld [vmem:[%s3 + $0xe0] sm:$0xff]
    %v566 = vld [vmem:[%s3 + $0xe8] sm:$0xff]
    %v567 = vld [vmem:[%s3 + $0xf0] sm:$0xff]
    %v568 = vld [vmem:[%s3 + $0xf8] sm:$0xff]
    %v569 = vld [vmem:[%s3 + $0x100] sm:$0xff]
    %v570 = vld [vmem:[%s3 + $0x108] sm:$0xff]
    %v571 = vld [vmem:[%s3 + $0x110] sm:$0xff]
    %v572 = vld [vmem:[%s3 + $0x118] sm:$0xff]
    %v573 = vld [vmem:[%s3 + $0x120] sm:$0xff]
    %v574 = vld [vmem:[%s3 + $0x128] sm:$0xff]
    %v575 = vld [vmem:[%s3 + $0x130] sm:$0xff]
    %v576 = vld [vmem:[%s3 + $0x138] sm:$0xff]
    %v577 = vld [vmem:[%s4] sm:$0x1]
    %vm578 = vcmask 523264
    %v580 = vsel %vm578, %v536, 0
    %582 = vmatprep.subr.mxu0 0.0
    %583 = vmatpush1.msra.mxu0 %v552
    %584 = vmatprep.subr.mxu0 0.0
    %585 = vmatpush1.msra.mxu0 %v551
    %586 = vmatprep.subr.mxu0 0.0
    %587 = vmatpush1.msra.mxu0 %v550
    %588 = vmatprep.subr.mxu0 0.0
    %589 = vmatpush1.msra.mxu0 %v549
    %590 = vmatprep.subr.mxu0 0.0
    %591 = vmatpush1.msra.mxu0 %v548
    %592 = vmatprep.subr.mxu0 0.0
    %593 = vmatpush1.msra.mxu0 %v547
    %594 = vmatprep.subr.mxu0 0.0
    %595 = vmatpush1.msra.mxu0 %v546
    %596 = vmatprep.subr.mxu0 0.0
    %597 = vmatpush1.msra.mxu0 %v545
    %598 = vmatprep.subr.mxu0 0.0
    %599 = vmatpush1.msra.mxu0 %v544
    %600 = vmatprep.subr.mxu0 0.0
    %601 = vmatpush1.msra.mxu0 %v543
    %602 = vmatprep.subr.mxu0 0.0
    %603 = vmatpush1.msra.mxu0 %v542
    %604 = vmatprep.subr.mxu0 0.0
    %605 = vmatpush1.msra.mxu0 %v541
    %606 = vmatprep.subr.mxu0 0.0
    %607 = vmatpush1.msra.mxu0 %v540
    %608 = vmatprep.subr.mxu0 0.0
    %609 = vmatpush1.msra.mxu0 %v539
    %610 = vmatprep.subr.mxu0 0.0
    %611 = vmatpush1.msra.mxu0 %v538
    %612 = vmatprep.subr.mxu0 0.0
    %613 = vmatpush1.msra.mxu0 %v537
    %614 = vmatprep.subr.mxu0 0.0
    %615 = vmatpush2.msra.mxu0 %v568
    %616 = vmatprep.subr.mxu0 0.0
    %617 = vmatpush2.msra.mxu0 %v567
    %618 = vmatprep.subr.mxu0 0.0
    %619 = vmatpush2.msra.mxu0 %v566
    %620 = vmatprep.subr.mxu0 0.0
    %621 = vmatpush2.msra.mxu0 %v565
    %622 = vmatprep.subr.mxu0 0.0
    %623 = vmatpush2.msra.mxu0 %v564
    %624 = vmatprep.subr.mxu0 0.0
    %625 = vmatpush2.msra.mxu0 %v563
    %626 = vmatprep.subr.mxu0 0.0
    %627 = vmatpush2.msra.mxu0 %v562
    %628 = vmatprep.subr.mxu0 0.0
    %629 = vmatpush2.msra.mxu0 %v561
    %630 = vmatprep.subr.mxu0 0.0
    %631 = vmatpush2.msra.mxu0 %v560
    %632 = vmatprep.subr.mxu0 0.0
    %633 = vmatpush2.msra.mxu0 %v559
    %634 = vmatprep.subr.mxu0 0.0
    %635 = vmatpush2.msra.mxu0 %v558
    %636 = vmatprep.subr.mxu0 0.0
    %637 = vmatpush2.msra.mxu0 %v557
    %638 = vmatprep.subr.mxu0 0.0
    %639 = vmatpush2.msra.mxu0 %v556
    %640 = vmatprep.subr.mxu0 0.0
    %641 = vmatpush2.msra.mxu0 %v555
    %642 = vmatprep.subr.mxu0 0.0
    %643 = vmatpush2.msra.mxu0 %v554
    %644 = vmatprep.subr.mxu0 0.0
    %645 = vmatpush2.msra.mxu0 %v553
    %646 = vmatprep.mubr.f32.mxu0 %v535
    %647 = vmatmul.mubr.f32.gmra.mxu0 %v534
    %v648 = vpop.f32.mrf.mxu0
    %v649 = vadd.f32 %v577, %v648
    %v650 = vpop.f32.mrf.mxu0
    %651 = vdwg.mxu0
    %652 = vmatprep.subr.mxu0 0.0
    %653 = vmatpush1.msra.mxu0 0.0
    %654 = vmatprep.subr.mxu0 0.0
    %655 = vmatpush1.msra.mxu0 0.0
    %656 = vmatprep.subr.mxu0 0.0
    %657 = vmatpush1.msra.mxu0 0.0
    %658 = vmatprep.subr.mxu0 0.0
    %659 = vmatpush1.msra.mxu0 0.0
    %660 = vmatprep.subr.mxu0 0.0
    %661 = vmatpush1.msra.mxu0 0.0
    %662 = vmatprep.subr.mxu0 0.0
    %663 = vmatpush1.msra.mxu0 0.0
    %664 = vmatprep.subr.mxu0 0.0
    %665 = vmatpush1.msra.mxu0 0.0
    %666 = vmatprep.subr.mxu0 0.0
    %667 = vmatpush1.msra.mxu0 0.0
    %668 = vmatprep.subr.mxu0 0.0
    %669 = vmatpush1.msra.mxu0 %v576
    %670 = vmatprep.subr.mxu0 0.0
    %671 = vmatpush1.msra.mxu0 %v575
    %672 = vmatprep.subr.mxu0 0.0
    %673 = vmatpush1.msra.mxu0 %v574
    %674 = vmatprep.subr.mxu0 0.0
    %675 = vmatpush1.msra.mxu0 %v573
    %676 = vmatprep.subr.mxu0 0.0
    %677 = vmatpush1.msra.mxu0 %v572
    %678 = vmatprep.subr.mxu0 0.0
    %679 = vmatpush1.msra.mxu0 %v571
    %680 = vmatprep.subr.mxu0 0.0
    %681 = vmatpush1.msra.mxu0 %v570
    %682 = vmatprep.subr.mxu0 0.0
    %683 = vmatpush1.msra.mxu0 %v569
    %684 = vmatprep.subr.mxu0 0.0
    %685 = vmatpush2.msra.mxu0 0.0
    %686 = vmatprep.subr.mxu0 0.0
    %687 = vmatpush2.msra.mxu0 0.0
    %688 = vmatprep.subr.mxu0 0.0
    %689 = vmatpush2.msra.mxu0 0.0
    %690 = vmatprep.subr.mxu0 0.0
    %691 = vmatpush2.msra.mxu0 0.0
    %692 = vmatprep.subr.mxu0 0.0
    %693 = vmatpush2.msra.mxu0 0.0
    %694 = vmatprep.subr.mxu0 0.0
    %695 = vmatpush2.msra.mxu0 0.0
    %696 = vmatprep.subr.mxu0 0.0
    %697 = vmatpush2.msra.mxu0 0.0
    %698 = vmatprep.subr.mxu0 0.0
    %699 = vmatpush2.msra.mxu0 0.0
    %700 = vmatprep.subr.mxu0 0.0
    %701 = vmatpush2.msra.mxu0 0.0
    %702 = vmatprep.subr.mxu0 0.0
    %703 = vmatpush2.msra.mxu0 0.0
    %704 = vmatprep.subr.mxu0 0.0
    %705 = vmatpush2.msra.mxu0 0.0
    %706 = vmatprep.subr.mxu0 0.0
    %707 = vmatpush2.msra.mxu0 0.0
    %708 = vmatprep.subr.mxu0 0.0
    %709 = vmatpush2.msra.mxu0 0.0
    %710 = vmatprep.subr.mxu0 0.0
    %711 = vmatpush2.msra.mxu0 0.0
    %712 = vmatprep.subr.mxu0 0.0
    %713 = vmatpush2.msra.mxu0 0.0
    %714 = vmatprep.subr.mxu0 0.0
    %715 = vmatpush2.msra.mxu0 0.0
    %716 = vmatprep.mubr.f32.mxu0 0.0
    %717 = vmatmul.mubr.f32.gmra.mxu0 %v580
    %v718 = vpop.f32.mrf.mxu0
    %v719 = vadd.f32 %v649, %v718
    %v720 = vpop.f32.mrf.mxu0
    %721 = vdwg.mxu0
    %722 = vst [vmem:[#allocation2] sm:$0x1] %v719
    // Predicated region
    $region22: #{tpu_custom_call.1} parent=1 // pred_check
      _
    $region23: #{tpu_custom_call.1} parent=1 // pred_check_branch
      %724 = sbr.rel (0) target = $region25
    $region24: #{tpu_custom_call.1} parent=1 // pred_region
      %s726 = ssub.s32 16, 16
      %727 = vsyncadd [#allocation3], %s726
      %s729 = sshll.u32 [#allocation2], 4
      %s730 = int_to_ptr.vmem [resolvable:$true] %s729
      %732 = dma.vmem_to_hbm [thread:$0]  %s730, 16, %s5, [#allocation3]
    $region25: #{tpu_custom_call.1} parent=1 // pred_fallthru
      _
    // Predicated region
    $region26: #{tpu_custom_call.1} parent=1 // pred_check
      _
    $region27: #{tpu_custom_call.1} parent=1 // pred_check_branch
      %734 = sbr.rel (0) target = $region29
    $region28: #{tpu_custom_call.1} parent=1 // pred_region
      %735 = dma.done [#allocation3], 16
    $region29: #{tpu_custom_call.1} parent=1 // pred_fallthru
      _
    %736 = vsyncpa [#allocation3], 1

</llo_original>
